<compile_context>
chip_gen: v7x
topology: tpu7x:2x2x1
jax: 0.10.0
libtpu: 0.0.40
codegen_flags: <defaults>
</compile_context>

<pallas_src>
import math

import jax
import jax.numpy as jnp
from jax.experimental import pallas as pl
from jax.experimental.pallas import tpu as pltpu


_HALF_LOG_2PI = 0.5 * math.log(2.0 * math.pi)


# ---------------------------------------------------------------------------
# Pallas kernel: full Actor_Linear forward for one batch tile
# ---------------------------------------------------------------------------
def actor_kernel(
    x_ref, eps_ref,
    w1_ref, b1_ref,
    w2_ref, b2_ref,
    w3_ref, b3_ref,
    wh_ref, bh_ref,        # fused [mean | std] head weight / bias
    out_ref,               # packed [action | log_prob] slab
):
    a_dim = eps_ref.shape[1]

    # --- hidden stack: bf16 MXU operands, f32 accumulation, f32 elementwise ---
    h = jnp.dot(x_ref[...].astype(jnp.bfloat16), w1_ref[...],
                preferred_element_type=jnp.float32)
    h = jnp.maximum(h + b1_ref[...], 0.0)
    h = jnp.dot(h.astype(jnp.bfloat16), w2_ref[...],
                preferred_element_type=jnp.float32)
    h = jnp.maximum(h + b2_ref[...], 0.0)
    h = jnp.dot(h.astype(jnp.bfloat16), w3_ref[...],
                preferred_element_type=jnp.float32)
    h = jnp.maximum(h + b3_ref[...], 0.0)

    # --- fused mean|log_std head: one matmul with N = 2*action_dim ---
    head = jnp.dot(h.astype(jnp.bfloat16), wh_ref[...],
                   preferred_element_type=jnp.float32) + bh_ref[...]
    mean = head[:, :a_dim]
    log_std = head[:, a_dim:]

    # std = softplus(log_std);  Normal(mean, std).log_prob(mean + std*eps)
    #   = -eps^2/2 - log(std) - 0.5*log(2*pi)
    std = jnp.logaddexp(log_std, 0.0)
    eps = eps_ref[...]
    log_prob = -0.5 * eps * eps - jnp.log(std) - _HALF_LOG_2PI

    # --- squashing: column 0 -> tanh, column 1 -> sigmoid (as in the module) ---
    col = jax.lax.broadcasted_iota(jnp.int32, mean.shape, dimension=1)
    is_col0 = col == 0
    sig = pl.reciprocal(1.0 + jnp.exp(-mean), approx=True)   # EUP-friendly sigmoid
    action_raw = jnp.where(is_col0, jnp.tanh(mean), sig)

    # Reference quirk kept on purpose: tanh-Jacobian correction is applied to the
    # *already squashed* action (both columns), exactly like the PyTorch code.
    t = jnp.tanh(action_raw)
    log_prob = log_prob - jnp.log(1.0 - t * t + 1e-07)

    # scale: col0 *= 2.5 ; col1 *= 0.22
    action = jnp.where(is_col0, action_raw * 2.5, action_raw * 0.22)

    # Single full-slab store (both halves live in the same 128-lane vreg;
    # avoid two masked partial stores with a store-store hazard).
    out_ref[...] = jnp.concatenate([action, log_prob], axis=-1).astype(out_ref.dtype)


# ---------------------------------------------------------------------------
# Parameter prep (hoisted out of the hot path) and wrapper
# ---------------------------------------------------------------------------
def _round_up(n, m):
    return ((n + m - 1) // m) * m


def prepare_actor_params(params):
    """One-time prep: bf16 MXU weights + fused [mean|std] head. Call once."""
    return {
        "w1": params["w1"].astype(jnp.bfloat16),
        "b1": params["b1"],
        "w2": params["w2"].astype(jnp.bfloat16),
        "b2": params["b2"],
        "w3": params["w3"].astype(jnp.bfloat16),
        "b3": params["b3"],
        "wh": jnp.concatenate([params["wm"], params["ws"]], axis=1).astype(jnp.bfloat16),
        "bh": jnp.concatenate([params["bm"], params["bs"]], axis=1),
    }


def actor_linear_forward(x, eps, prepped, *, tile_b=1024):
    """x: [B, state_dim] f32, eps: [B, action_dim] noise, prepped: prepare_actor_params()."""
    B, state_dim = x.shape
    action_dim = eps.shape[1]

    w1, b1 = prepped["w1"], prepped["b1"]
    w2, b2 = prepped["w2"], prepped["b2"]
    w3, b3 = prepped["w3"], prepped["b3"]
    wh, bh = prepped["wh"], prepped["bh"]

    # --- batch tile selection -------------------------------------------------
    # Multiples of 16 (bf16 sublane packing); default 1024 amortizes the ~0.35us
    # per-grid-step overhead.  When the padded batch allows >= 2 tiles, cap the
    # tile so the grid keeps >= 2 steps and the "parallel" axis can shard across
    # both v7x TensorCores.
    b16 = _round_up(B, 16)
    tb = min(tile_b, b16)
    if b16 >= 32:
        tb = min(tb, _round_up((b16 + 1) // 2, 16))
    tb = max(tb, 16)
    b_pad = _round_up(B, tb)
    if b_pad != B:
        x = jnp.pad(x, ((0, b_pad - B), (0, 0)))
        eps = jnp.pad(eps, ((0, b_pad - B), (0, 0)))

    tiled = lambda feat: pl.BlockSpec((tb, feat), lambda i: (i, 0))
    pinned = lambda arr: pl.BlockSpec(arr.shape, lambda i: (0, 0))

    out = pl.pallas_call(
        actor_kernel,
        out_shape=jax.ShapeDtypeStruct((b_pad, 2 * action_dim), jnp.float32),
        grid_spec=pltpu.PrefetchScalarGridSpec(
            num_scalar_prefetch=0,
            grid=(pl.cdiv(b_pad, tb),),
            in_specs=[
                tiled(state_dim),        # x        (pipelined per tile)
                tiled(action_dim),       # eps      (pipelined per tile)
                pinned(w1), pinned(b1),  # weights/biases stay VMEM-resident
                pinned(w2), pinned(b2),
                pinned(w3), pinned(b3),
                pinned(wh), pinned(bh),
            ],
            out_specs=tiled(2 * action_dim),
        ),
        compiler_params=pltpu.CompilerParams(
            dimension_semantics=("parallel",),       # v7x megacore over batch tiles
            vmem_limit_bytes=32 * 1024 * 1024,
        ),
    )(x, eps, w1, b1, w2, b2, w3, b3, wh, bh)

    action = out[:B, :action_dim]
    log_prob = out[:B, action_dim:]
    return action, log_prob


# ---------------------------------------------------------------------------
# Parameter init (Xavier uniform for W, zeros for b) and pure-JAX reference
# ---------------------------------------------------------------------------
def xavier_uniform(key, fan_in, fan_out):
    limit = math.sqrt(6.0 / (fan_in + fan_out))
    return jax.random.uniform(
        key, (fan_in, fan_out), minval=-limit, maxval=limit, dtype=jnp.float32
    )


def init_params(key, state_dim, action_dim):
    ks = jax.random.split(key, 5)
    dims = [(state_dim, 512), (512, 256), (256, 64),
            (64, action_dim), (64, action_dim)]
    names = ["1", "2", "3", "m", "s"]
    params = {}
    for k, (fi, fo), n in zip(ks, dims, names):
        params[f"w{n}"] = xavier_uniform(k, fi, fo)
        params[f"b{n}"] = jnp.zeros((1, fo), dtype=jnp.float32)  # broadcast over batch
    return params


def actor_reference(x, eps, params):
    """Pure-JAX f32 reference mirroring the PyTorch module (incl. its quirks)."""
    h = jax.nn.relu(x @ params["w1"] + params["b1"])
    h = jax.nn.relu(h @ params["w2"] + params["b2"])
    h = jax.nn.relu(h @ params["w3"] + params["b3"])
    mean = h @ params["wm"] + params["bm"]
    log_std = h @ params["ws"] + params["bs"]
    std = jax.nn.softplus(log_std)
    log_prob = -0.5 * eps * eps - jnp.log(std) - _HALF_LOG_2PI
    action = jnp.stack([jnp.tanh(mean[:, 0]), jax.nn.sigmoid(mean[:, 1])], axis=1)
    log_prob = log_prob - jnp.log(1.0 - jnp.tanh(action) ** 2 + 1e-07)
    action = action * jnp.array([2.5, 0.22], dtype=jnp.float32)
    return action, log_prob


if __name__ == "__main__":
    B, state_dim, action_dim = 8, 16, 2   # module hard-codes 2 action columns

    key = jax.random.PRNGKey(0)
    k_param, k_x, k_eps = jax.random.split(key, 3)

    params = init_params(k_param, state_dim, action_dim)
    prepped = prepare_actor_params(params)   # one-time: bf16 cast + head fusion
    x = jax.random.normal(k_x, (B, state_dim), dtype=jnp.float32)
    eps = jax.random.normal(k_eps, (B, action_dim), dtype=jnp.float32)

    action, log_prob = actor_linear_forward(x, eps, prepped)
    jax.block_until_ready((action, log_prob))

    a_ref, lp_ref = actor_reference(x, eps, params)
    assert action.shape == (B, 2) and log_prob.shape == (B, action_dim)
    assert bool(jnp.all(jnp.isfinite(action))) and bool(jnp.all(jnp.isfinite(log_prob)))
    assert float(jnp.max(jnp.abs(action - a_ref))) < 0.1, "action mismatch vs reference"
    assert float(jnp.max(jnp.abs(log_prob - lp_ref))) < 0.1, "log_prob mismatch vs reference"

    # Exercise the multi-step batch grid (padding to 16, >=2 grid steps,
    # weights pinned across steps).
    B2 = 20
    x2 = jax.random.normal(jax.random.PRNGKey(1), (B2, state_dim), dtype=jnp.float32)
    eps2 = jax.random.normal(jax.random.PRNGKey(2), (B2, action_dim), dtype=jnp.float32)
    a2, lp2 = actor_linear_forward(x2, eps2, prepped)
    jax.block_until_ready((a2, lp2))
    a2_ref, lp2_ref = actor_reference(x2, eps2, params)
    assert a2.shape == (B2, 2) and lp2.shape == (B2, action_dim)
    assert float(jnp.max(jnp.abs(a2 - a2_ref))) < 0.1
    assert float(jnp.max(jnp.abs(lp2 - lp2_ref))) < 0.1

    print("KERNEL_OK")
</pallas_src>

<mosaic_0001>
module attributes {stable_mosaic.version = 11 : i64} {
  func.func @actor_kernel(%arg0: i32, %arg1: memref<16x16xf32, #tpu.memory_space<vmem>>, %arg2: memref<16x2xf32, #tpu.memory_space<vmem>>, %arg3: memref<16x512xbf16, #tpu.memory_space<vmem>>, %arg4: memref<1x512xf32, #tpu.memory_space<vmem>>, %arg5: memref<512x256xbf16, #tpu.memory_space<vmem>>, %arg6: memref<1x256xf32, #tpu.memory_space<vmem>>, %arg7: memref<256x64xbf16, #tpu.memory_space<vmem>>, %arg8: memref<1x64xf32, #tpu.memory_space<vmem>>, %arg9: memref<64x4xbf16, #tpu.memory_space<vmem>>, %arg10: memref<1x4xf32, #tpu.memory_space<vmem>>, %arg11: memref<16x4xf32, #tpu.memory_space<vmem>>) attributes {dimension_semantics = [#tpu.dimension_semantics<parallel>], iteration_bounds = array<i64: 1>, scalar_prefetch = 0 : i64, scratch_operands = 0 : i64, tpu.core_type = #tpu.core_type<tc>, window_params = [{transform_indices = @transform_0, window_bounds = array<i64: 16, 16>}, {transform_indices = @transform_1, window_bounds = array<i64: 16, 2>}, {pipeline_mode = #tpu.pipeline_mode<synchronous>, transform_indices = @transform_2, window_bounds = array<i64: 16, 512>}, {pipeline_mode = #tpu.pipeline_mode<synchronous>, transform_indices = @transform_3, window_bounds = array<i64: 1, 512>}, {pipeline_mode = #tpu.pipeline_mode<synchronous>, transform_indices = @transform_4, window_bounds = array<i64: 512, 256>}, {pipeline_mode = #tpu.pipeline_mode<synchronous>, transform_indices = @transform_5, window_bounds = array<i64: 1, 256>}, {pipeline_mode = #tpu.pipeline_mode<synchronous>, transform_indices = @transform_6, window_bounds = array<i64: 256, 64>}, {pipeline_mode = #tpu.pipeline_mode<synchronous>, transform_indices = @transform_7, window_bounds = array<i64: 1, 64>}, {pipeline_mode = #tpu.pipeline_mode<synchronous>, transform_indices = @transform_8, window_bounds = array<i64: 64, 4>}, {pipeline_mode = #tpu.pipeline_mode<synchronous>, transform_indices = @transform_9, window_bounds = array<i64: 1, 4>}, {transform_indices = @transform_10, window_bounds = array<i64: 16, 4>}]} {
    %c0 = arith.constant 0 : index
    %c0_0 = arith.constant 0 : index
    %0 = vector.load %arg1[%c0, %c0_0] : memref<16x16xf32, #tpu.memory_space<vmem>>, vector<16x16xf32>
    %1 = arith.truncf %0 : vector<16x16xf32> to vector<16x16xbf16>
    %c0_1 = arith.constant 0 : index
    %c0_2 = arith.constant 0 : index
    %2 = vector.load %arg3[%c0_1, %c0_2] : memref<16x512xbf16, #tpu.memory_space<vmem>>, vector<16x512xbf16>
    %cst = arith.constant dense<0.000000e+00> : vector<16x512xf32>
    %3 = tpu.matmul %1, %2, %cst {dimension_numbers = #tpu.dot_dimension_numbers<[1], [0], [0], [1], [0, 0, 1, 1], [], []>} : vector<16x16xbf16>, vector<16x512xbf16>, vector<16x512xf32> -> vector<16x512xf32>
    %c0_3 = arith.constant 0 : index
    %c0_4 = arith.constant 0 : index
    %4 = vector.load %arg4[%c0_3, %c0_4] : memref<1x512xf32, #tpu.memory_space<vmem>>, vector<1x512xf32>
    %5 = vector.broadcast %4 : vector<1x512xf32> to vector<16x512xf32>
    %6 = arith.addf %3, %5 : vector<16x512xf32>
    %cst_5 = arith.constant 0.000000e+00 : f32
    %7 = vector.broadcast %cst_5 : f32 to vector<16x512xf32>
    %8 = arith.maximumf %6, %7 : vector<16x512xf32>
    %9 = arith.truncf %8 : vector<16x512xf32> to vector<16x512xbf16>
    %c0_6 = arith.constant 0 : index
    %c0_7 = arith.constant 0 : index
    %10 = vector.load %arg5[%c0_6, %c0_7] : memref<512x256xbf16, #tpu.memory_space<vmem>>, vector<512x256xbf16>
    %cst_8 = arith.constant dense<0.000000e+00> : vector<16x256xf32>
    %11 = tpu.matmul %9, %10, %cst_8 {dimension_numbers = #tpu.dot_dimension_numbers<[1], [0], [0], [1], [0, 0, 1, 1], [], []>} : vector<16x512xbf16>, vector<512x256xbf16>, vector<16x256xf32> -> vector<16x256xf32>
    %c0_9 = arith.constant 0 : index
    %c0_10 = arith.constant 0 : index
    %12 = vector.load %arg6[%c0_9, %c0_10] : memref<1x256xf32, #tpu.memory_space<vmem>>, vector<1x256xf32>
    %13 = vector.broadcast %12 : vector<1x256xf32> to vector<16x256xf32>
    %14 = arith.addf %11, %13 : vector<16x256xf32>
    %cst_11 = arith.constant 0.000000e+00 : f32
    %15 = vector.broadcast %cst_11 : f32 to vector<16x256xf32>
    %16 = arith.maximumf %14, %15 : vector<16x256xf32>
    %17 = arith.truncf %16 : vector<16x256xf32> to vector<16x256xbf16>
    %c0_12 = arith.constant 0 : index
    %c0_13 = arith.constant 0 : index
    %18 = vector.load %arg7[%c0_12, %c0_13] : memref<256x64xbf16, #tpu.memory_space<vmem>>, vector<256x64xbf16>
    %cst_14 = arith.constant dense<0.000000e+00> : vector<16x64xf32>
    %19 = tpu.matmul %17, %18, %cst_14 {dimension_numbers = #tpu.dot_dimension_numbers<[1], [0], [0], [1], [0, 0, 1, 1], [], []>} : vector<16x256xbf16>, vector<256x64xbf16>, vector<16x64xf32> -> vector<16x64xf32>
    %c0_15 = arith.constant 0 : index
    %c0_16 = arith.constant 0 : index
    %20 = vector.load %arg8[%c0_15, %c0_16] : memref<1x64xf32, #tpu.memory_space<vmem>>, vector<1x64xf32>
    %21 = vector.broadcast %20 : vector<1x64xf32> to vector<16x64xf32>
    %22 = arith.addf %19, %21 : vector<16x64xf32>
    %cst_17 = arith.constant 0.000000e+00 : f32
    %23 = vector.broadcast %cst_17 : f32 to vector<16x64xf32>
    %24 = arith.maximumf %22, %23 : vector<16x64xf32>
    %25 = arith.truncf %24 : vector<16x64xf32> to vector<16x64xbf16>
    %c0_18 = arith.constant 0 : index
    %c0_19 = arith.constant 0 : index
    %26 = vector.load %arg9[%c0_18, %c0_19] : memref<64x4xbf16, #tpu.memory_space<vmem>>, vector<64x4xbf16>
    %cst_20 = arith.constant dense<0.000000e+00> : vector<16x4xf32>
    %27 = tpu.matmul %25, %26, %cst_20 {dimension_numbers = #tpu.dot_dimension_numbers<[1], [0], [0], [1], [0, 0, 1, 1], [], []>} : vector<16x64xbf16>, vector<64x4xbf16>, vector<16x4xf32> -> vector<16x4xf32>
    %c0_21 = arith.constant 0 : index
    %c0_22 = arith.constant 0 : index
    %28 = vector.load %arg10[%c0_21, %c0_22] : memref<1x4xf32, #tpu.memory_space<vmem>>, vector<1x4xf32>
    %29 = vector.broadcast %28 : vector<1x4xf32> to vector<16x4xf32>
    %30 = arith.addf %27, %29 : vector<16x4xf32>
    %31 = vector.extract_strided_slice %30 {offsets = [0, 0], sizes = [16, 2], strides = [1, 1]} : vector<16x4xf32> to vector<16x2xf32>
    %32 = vector.extract_strided_slice %30 {offsets = [0, 2], sizes = [16, 2], strides = [1, 1]} : vector<16x4xf32> to vector<16x2xf32>
    %cst_23 = arith.constant 0.000000e+00 : f32
    %33 = vector.broadcast %cst_23 : f32 to vector<16x2xf32>
    %34 = arith.maximumf %32, %33 : vector<16x2xf32>
    %35 = vector.broadcast %cst_23 : f32 to vector<16x2xf32>
    %36 = arith.subf %32, %35 : vector<16x2xf32>
    %37 = arith.cmpf one, %36, %36 : vector<16x2xf32>
    %38 = vector.broadcast %cst_23 : f32 to vector<16x2xf32>
    %39 = arith.addf %32, %38 : vector<16x2xf32>
    %40 = math.absf %36 : vector<16x2xf32>
    %cst_24 = arith.constant 0.000000e+00 : f32
    %41 = vector.broadcast %cst_24 : f32 to vector<16x2xf32>
    %42 = arith.subf %41, %40 : vector<16x2xf32>
    %43 = math.exp %42 : vector<16x2xf32>
    %44 = math.log1p %43 : vector<16x2xf32>
    %45 = arith.addf %34, %44 : vector<16x2xf32>
    %46 = arith.select %37, %39, %45 : vector<16x2xi1>, vector<16x2xf32>
    %c0_25 = arith.constant 0 : index
    %c0_26 = arith.constant 0 : index
    %47 = vector.load %arg2[%c0_25, %c0_26] : memref<16x2xf32, #tpu.memory_space<vmem>>, vector<16x2xf32>
    %cst_27 = arith.constant -5.000000e-01 : f32
    %48 = vector.broadcast %cst_27 : f32 to vector<16x2xf32>
    %49 = arith.mulf %48, %47 : vector<16x2xf32>
    %50 = arith.mulf %49, %47 : vector<16x2xf32>
    %51 = math.log %46 : vector<16x2xf32>
    %52 = arith.subf %50, %51 : vector<16x2xf32>
    %cst_28 = arith.constant 0.918938517 : f32
    %53 = vector.broadcast %cst_28 : f32 to vector<16x2xf32>
    %54 = arith.subf %52, %53 : vector<16x2xf32>
    %55 = tpu.iota {dimensions = array<i32: 1>} : vector<16x2xi32>
    %c0_i32 = arith.constant 0 : i32
    %56 = vector.broadcast %c0_i32 : i32 to vector<16x2xi32>
    %57 = arith.cmpi eq, %55, %56 : vector<16x2xi32>
    %cst_29 = arith.constant 0.000000e+00 : f32
    %58 = vector.broadcast %cst_29 : f32 to vector<16x2xf32>
    %59 = arith.subf %58, %31 : vector<16x2xf32>
    %60 = math.exp %59 : vector<16x2xf32>
    %cst_30 = arith.constant 1.000000e+00 : f32
    %61 = vector.broadcast %cst_30 : f32 to vector<16x2xf32>
    %62 = arith.addf %61, %60 : vector<16x2xf32>
    %63 = tpu.reciprocal %62 {approx = true} : vector<16x2xf32> -> vector<16x2xf32>
    %64 = math.tanh %31 : vector<16x2xf32>
    %65 = arith.select %57, %64, %63 : vector<16x2xi1>, vector<16x2xf32>
    %66 = math.tanh %65 : vector<16x2xf32>
    %67 = arith.mulf %66, %66 : vector<16x2xf32>
    %cst_31 = arith.constant 1.000000e+00 : f32
    %68 = vector.broadcast %cst_31 : f32 to vector<16x2xf32>
    %69 = arith.subf %68, %67 : vector<16x2xf32>
    %cst_32 = arith.constant 1.000000e-07 : f32
    %70 = vector.broadcast %cst_32 : f32 to vector<16x2xf32>
    %71 = arith.addf %69, %70 : vector<16x2xf32>
    %72 = math.log %71 : vector<16x2xf32>
    %73 = arith.subf %54, %72 : vector<16x2xf32>
    %cst_33 = arith.constant 2.500000e+00 : f32
    %74 = vector.broadcast %cst_33 : f32 to vector<16x2xf32>
    %75 = arith.mulf %65, %74 : vector<16x2xf32>
    %cst_34 = arith.constant 2.200000e-01 : f32
    %76 = vector.broadcast %cst_34 : f32 to vector<16x2xf32>
    %77 = arith.mulf %65, %76 : vector<16x2xf32>
    %78 = arith.select %57, %75, %77 : vector<16x2xi1>, vector<16x2xf32>
    %79 = tpu.concatenate %78, %73 in 1 : vector<16x2xf32>, vector<16x2xf32> -> vector<16x4xf32>
    %c0_35 = arith.constant 0 : index
    %c0_36 = arith.constant 0 : index
    %80 = vector.load %arg11[%c0_35, %c0_36] : memref<16x4xf32, #tpu.memory_space<vmem>>, vector<16x4xf32>
    tpu.vector_store %arg11[%c0_35, %c0_36], %79 {strides = array<i32>} : memref<16x4xf32, #tpu.memory_space<vmem>>, vector<16x4xf32>,
    return
  }
  func.func @transform_0(%arg0: i32) -> (i32, i32) {
    %c0_i32 = arith.constant 0 : i32
    %c0_i32_0 = arith.constant 0 : i32
    return %arg0, %c0_i32 : i32, i32
  }
  func.func @transform_1(%arg0: i32) -> (i32, i32) {
    %c0_i32 = arith.constant 0 : i32
    %c0_i32_0 = arith.constant 0 : i32
    return %arg0, %c0_i32 : i32, i32
  }
  func.func @transform_2(%arg0: i32) -> (i32, i32) {
    %c0_i32 = arith.constant 0 : i32
    %c0_i32_0 = arith.constant 0 : i32
    %c0_i32_1 = arith.constant 0 : i32
    return %c0_i32, %c0_i32_0 : i32, i32
  }
  func.func @transform_3(%arg0: i32) -> (i32, i32) {
    %c0_i32 = arith.constant 0 : i32
    %c0_i32_0 = arith.constant 0 : i32
    %c0_i32_1 = arith.constant 0 : i32
    return %c0_i32, %c0_i32_0 : i32, i32
  }
  func.func @transform_4(%arg0: i32) -> (i32, i32) {
    %c0_i32 = arith.constant 0 : i32
    %c0_i32_0 = arith.constant 0 : i32
    %c0_i32_1 = arith.constant 0 : i32
    return %c0_i32, %c0_i32_0 : i32, i32
  }
  func.func @transform_5(%arg0: i32) -> (i32, i32) {
    %c0_i32 = arith.constant 0 : i32
    %c0_i32_0 = arith.constant 0 : i32
    %c0_i32_1 = arith.constant 0 : i32
    return %c0_i32, %c0_i32_0 : i32, i32
  }
  func.func @transform_6(%arg0: i32) -> (i32, i32) {
    %c0_i32 = arith.constant 0 : i32
    %c0_i32_0 = arith.constant 0 : i32
    %c0_i32_1 = arith.constant 0 : i32
    return %c0_i32, %c0_i32_0 : i32, i32
  }
  func.func @transform_7(%arg0: i32) -> (i32, i32) {
    %c0_i32 = arith.constant 0 : i32
    %c0_i32_0 = arith.constant 0 : i32
    %c0_i32_1 = arith.constant 0 : i32
    return %c0_i32, %c0_i32_0 : i32, i32
  }
  func.func @transform_8(%arg0: i32) -> (i32, i32) {
    %c0_i32 = arith.constant 0 : i32
    %c0_i32_0 = arith.constant 0 : i32
    %c0_i32_1 = arith.constant 0 : i32
    return %c0_i32, %c0_i32_0 : i32, i32
  }
  func.func @transform_9(%arg0: i32) -> (i32, i32) {
    %c0_i32 = arith.constant 0 : i32
    %c0_i32_0 = arith.constant 0 : i32
    %c0_i32_1 = arith.constant 0 : i32
    return %c0_i32, %c0_i32_0 : i32, i32
  }
  func.func @transform_10(%arg0: i32) -> (i32, i32) {
    %c0_i32 = arith.constant 0 : i32
    %c0_i32_0 = arith.constant 0 : i32
    return %arg0, %c0_i32 : i32, i32
  }
}

</mosaic_0001>

<llo_original>
// kernel: tpu_custom_call.1
$region0: #{tpu_custom_call.1}
  #allocation0 [shape = 'u32[]', space=smem, size = 0x4, offset = 0x4, fixed_abs, tag = 'smem constant byte address 0x4 - core index']
  #allocation1 [shape = 'u32[144,128]{1,0:T(1,128)}', space=vmem, size = 0x12000, scoped, tag = 'internal scratch']
  %s0 = inlined_call_operand.vmem [shape: f32[16,16], index: 0, kind: input, shape index: {}]
  %s1 = inlined_call_operand.vmem [shape: f32[16,2], index: 1, kind: input, shape index: {}]
  %s2 = inlined_call_operand.vmem [shape: bf16[16,512], index: 2, kind: input, shape index: {}]
  %s3 = inlined_call_operand.vmem [shape: f32[1,512], index: 3, kind: input, shape index: {}]
  %s4 = inlined_call_operand.hbm [shape: bf16[512,256], index: 4, kind: input, shape index: {}]
  %s5 = inlined_call_operand.vmem [shape: f32[1,256], index: 5, kind: input, shape index: {}]
  %s6 = inlined_call_operand.vmem [shape: bf16[256,64], index: 6, kind: input, shape index: {}]
  %s7 = inlined_call_operand.vmem [shape: f32[1,64], index: 7, kind: input, shape index: {}]
  %s8 = inlined_call_operand.vmem [shape: bf16[64,4], index: 8, kind: input, shape index: {}]
  %s9 = inlined_call_operand.vmem [shape: f32[1,4], index: 9, kind: input, shape index: {}]
  %s10 = inlined_call_operand.vmem [shape: f32[16,4], index: 10, kind: output, shape index: {}]
  %s11 = sld [smem:[#allocation0]]
  $region54: #{tpu_custom_call.1} parent=0
    _
  %s13 = ssub.s32 1, %s11
  %s14 = scalar_select 0, %s13, %s11
  $region1: #{tpu_custom_call.1} parent=0
    #allocation2 [shape = 'u8[262144]{0}', space=vmem, size = 0x40000, scoped, tag = 'input window, operand 4, single buffered']
    #allocation3 [shape = 's32[1]{0}', space=sflag, size = 0x4, scoped, tag = 'scoped memory for tpu_custom_call.1']
    %15 = vsyncpa [#allocation3], 0
    // Predicated region
    $region2: #{tpu_custom_call.1} parent=1 // pred_check
      _
    $region3: #{tpu_custom_call.1} parent=1 // pred_check_branch
      %17 = sbr.rel (0) target = $region5
    $region4: #{tpu_custom_call.1} parent=1 // pred_region
      _
    $region5: #{tpu_custom_call.1} parent=1 // pred_fallthru
      _
    // Predicated region
    $region6: #{tpu_custom_call.1} parent=1 // pred_check
      _
    $region7: #{tpu_custom_call.1} parent=1 // pred_check_branch
      %19 = sbr.rel (0) target = $region9
    $region8: #{tpu_custom_call.1} parent=1 // pred_region
      _
    $region9: #{tpu_custom_call.1} parent=1 // pred_fallthru
      _
    // Predicated region
    $region10: #{tpu_custom_call.1} parent=1 // pred_check
      _
    $region11: #{tpu_custom_call.1} parent=1 // pred_check_branch
      %21 = sbr.rel (0) target = $region13
    $region12: #{tpu_custom_call.1} parent=1 // pred_region
      _
    $region13: #{tpu_custom_call.1} parent=1 // pred_fallthru
      _
    // Predicated region
    $region14: #{tpu_custom_call.1} parent=1 // pred_check
      _
    $region15: #{tpu_custom_call.1} parent=1 // pred_check_branch
      %23 = sbr.rel (0) target = $region17
    $region16: #{tpu_custom_call.1} parent=1 // pred_region
      _
    $region17: #{tpu_custom_call.1} parent=1 // pred_fallthru
      _
    // Predicated region
    $region18: #{tpu_custom_call.1} parent=1 // pred_check
      _
    $region19: #{tpu_custom_call.1} parent=1 // pred_check_branch
      %25 = sbr.rel (0) target = $region21
    $region20: #{tpu_custom_call.1} parent=1 // pred_region
      %s27 = ssub.s32 8192, 8192
      %28 = vsyncadd [#allocation3], %s27
      %s29 = sshll.u32 [#allocation2], 4
      %s30 = int_to_ptr.vmem [resolvable:$true] %s29
      %35 = dma.hbm_to_vmem [thread:$0]  %s4, 8192, %s30, [#allocation3], 128, 128, 8
    $region21: #{tpu_custom_call.1} parent=1 // pred_fallthru
      _
    // Predicated region
    $region22: #{tpu_custom_call.1} parent=1 // pred_check
      _
    $region23: #{tpu_custom_call.1} parent=1 // pred_check_branch
      %37 = sbr.rel (0) target = $region25
    $region24: #{tpu_custom_call.1} parent=1 // pred_region
      _
    $region25: #{tpu_custom_call.1} parent=1 // pred_fallthru
      _
    // Predicated region
    $region26: #{tpu_custom_call.1} parent=1 // pred_check
      _
    $region27: #{tpu_custom_call.1} parent=1 // pred_check_branch
      %39 = sbr.rel (0) target = $region29
    $region28: #{tpu_custom_call.1} parent=1 // pred_region
      _
    $region29: #{tpu_custom_call.1} parent=1 // pred_fallthru
      _
    // Predicated region
    $region30: #{tpu_custom_call.1} parent=1 // pred_check
      _
    $region31: #{tpu_custom_call.1} parent=1 // pred_check_branch
      %41 = sbr.rel (0) target = $region33
    $region32: #{tpu_custom_call.1} parent=1 // pred_region
      _
    $region33: #{tpu_custom_call.1} parent=1 // pred_fallthru
      _
    // Predicated region
    $region34: #{tpu_custom_call.1} parent=1 // pred_check
      _
    $region35: #{tpu_custom_call.1} parent=1 // pred_check_branch
      %43 = sbr.rel (0) target = $region37
    $region36: #{tpu_custom_call.1} parent=1 // pred_region
      _
    $region37: #{tpu_custom_call.1} parent=1 // pred_fallthru
      _
    // Predicated region
    $region38: #{tpu_custom_call.1} parent=1 // pred_check
      _
    $region39: #{tpu_custom_call.1} parent=1 // pred_check_branch
      %45 = sbr.rel (0) target = $region41
    $region40: #{tpu_custom_call.1} parent=1 // pred_region
      _
    $region41: #{tpu_custom_call.1} parent=1 // pred_fallthru
      _
    // Predicated region
    $region42: #{tpu_custom_call.1} parent=1 // pred_check
      _
    $region43: #{tpu_custom_call.1} parent=1 // pred_check_branch
      %47 = sbr.rel (0) target = $region45
    $region44: #{tpu_custom_call.1} parent=1 // pred_region
      %48 = dma.done [#allocation3], 8192
    $region45: #{tpu_custom_call.1} parent=1 // pred_fallthru
      _
    %v50 = vld [vmem:[%s0] sm:$0xff]
    %v51 = vld [vmem:[%s0 + $0x8] sm:$0xff]
    %v52 = vpack.c.bf16 %v51, %v50
    %v53 = vld [vmem:[%s2] sm:$0xff]
    %v54 = vld [vmem:[%s2 + $0x8] sm:$0xff]
    %v55 = vld [vmem:[%s2 + $0x10] sm:$0xff]
    %v56 = vld [vmem:[%s2 + $0x18] sm:$0xff]
    %v57 = vld [vmem:[%s3] sm:$0xf]
    %v59 = vlaneseq
    %v60 = vshrl.u32 %v59, 7
    %v61 = vsub.s32 0, %v60
    %v62 = vrot.slane %v57, %v61
    %v63 = vlaneseq
    %v64 = vshrl.u32 %v63, 7
    %v65 = vsub.s32 1, %v64
    %v66 = vrot.slane %v57, %v65
    %v67 = vlaneseq
    %v68 = vshrl.u32 %v67, 7
    %v69 = vsub.s32 2, %v68
    %v70 = vrot.slane %v57, %v69
    %v71 = vlaneseq
    %v72 = vshrl.u32 %v71, 7
    %v73 = vsub.s32 3, %v72
    %v74 = vrot.slane %v57, %v73
    %v83 = vunpack.c.l.b16 %v53
    %v84 = vunpack.c.h.b16 %v53
    %v85 = vunpack.c.l.b16 %v54
    %v86 = vunpack.c.h.b16 %v54
    %v87 = vunpack.c.l.b16 %v55
    %v88 = vunpack.c.h.b16 %v55
    %v89 = vunpack.c.l.b16 %v56
    %v90 = vunpack.c.h.b16 %v56
    %v91 = vpack.c.b16 %v87, %v83
    %v92 = vpack.c.b16 %v88, %v84
    %v93 = vpack.c.b16 %v89, %v85
    %v94 = vpack.c.b16 %v90, %v86
    %vm99 = vcmask 130048
    %v101 = vsel %vm99, %v52, 0
    %103 = vmatprep.subr.bf16.mxu0 %v92
    %104 = vmatpush1.bf16.msra.mxu0 %v91
    %105 = vmatprep.subr.bf16.mxu0 0
    %106 = vmatpush1.bf16.msra.mxu0 0
    %107 = vmatprep.subr.bf16.mxu0 0
    %108 = vmatpush1.bf16.msra.mxu0 0
    %109 = vmatprep.subr.bf16.mxu0 0
    %110 = vmatpush1.bf16.msra.mxu0 0
    %111 = vmatprep.subr.bf16.mxu0 0
    %112 = vmatpush1.bf16.msra.mxu0 0
    %113 = vmatprep.subr.bf16.mxu0 0
    %114 = vmatpush1.bf16.msra.mxu0 0
    %115 = vmatprep.subr.bf16.mxu0 0
    %116 = vmatpush1.bf16.msra.mxu0 0
    %117 = vmatprep.subr.bf16.mxu0 0
    %118 = vmatpush1.bf16.msra.mxu0 0
    %119 = vmatprep.subr.bf16.mxu0 0
    %120 = vmatpush1.bf16.msra.mxu0 0
    %121 = vmatprep.subr.bf16.mxu0 0
    %122 = vmatpush1.bf16.msra.mxu0 0
    %123 = vmatprep.subr.bf16.mxu0 0
    %124 = vmatpush1.bf16.msra.mxu0 0
    %125 = vmatprep.subr.bf16.mxu0 0
    %126 = vmatpush1.bf16.msra.mxu0 0
    %127 = vmatprep.subr.bf16.mxu0 0
    %128 = vmatpush1.bf16.msra.mxu0 0
    %129 = vmatprep.subr.bf16.mxu0 0
    %130 = vmatpush1.bf16.msra.mxu0 0
    %131 = vmatprep.subr.bf16.mxu0 0
    %132 = vmatpush1.bf16.msra.mxu0 0
    %133 = vmatprep.subr.bf16.mxu0 0
    %134 = vmatpush1.bf16.msra.mxu0 0
    %135 = vmatprep.mubr.bf16.mxu0 0
    %136 = vmatmul.mubr.bf16.gmra.mrb[0].mxu0 %v101
    %v137 = vpop.f32.mrb[0].mxu0
    %v138 = vadd.f32 %v62, %v137
    %v139 = vpop.f32.mrb[0].mxu0
    %v140 = vadd.f32 %v66, %v139
    %v141 = vpop.f32.mrb[0].mxu0
    %v142 = vadd.f32 %v62, %v141
    %v143 = vpop.f32.mrb[0].mxu0
    %v144 = vadd.f32 %v66, %v143
    %145 = vdwg.mxu0
    %146 = vmatprep.subr.bf16.mxu0 %v94
    %147 = vmatpush1.bf16.msra.mxu0 %v93
    %148 = vmatprep.subr.bf16.mxu0 0
    %149 = vmatpush1.bf16.msra.mxu0 0
    %150 = vmatprep.subr.bf16.mxu0 0
    %151 = vmatpush1.bf16.msra.mxu0 0
    %152 = vmatprep.subr.bf16.mxu0 0
    %153 = vmatpush1.bf16.msra.mxu0 0
    %154 = vmatprep.subr.bf16.mxu0 0
    %155 = vmatpush1.bf16.msra.mxu0 0
    %156 = vmatprep.subr.bf16.mxu0 0
    %157 = vmatpush1.bf16.msra.mxu0 0
    %158 = vmatprep.subr.bf16.mxu0 0
    %159 = vmatpush1.bf16.msra.mxu0 0
    %160 = vmatprep.subr.bf16.mxu0 0
    %161 = vmatpush1.bf16.msra.mxu0 0
    %162 = vmatprep.subr.bf16.mxu0 0
    %163 = vmatpush1.bf16.msra.mxu0 0
    %164 = vmatprep.subr.bf16.mxu0 0
    %165 = vmatpush1.bf16.msra.mxu0 0
    %166 = vmatprep.subr.bf16.mxu0 0
    %167 = vmatpush1.bf16.msra.mxu0 0
    %168 = vmatprep.subr.bf16.mxu0 0
    %169 = vmatpush1.bf16.msra.mxu0 0
    %170 = vmatprep.subr.bf16.mxu0 0
    %171 = vmatpush1.bf16.msra.mxu0 0
    %172 = vmatprep.subr.bf16.mxu0 0
    %173 = vmatpush1.bf16.msra.mxu0 0
    %174 = vmatprep.subr.bf16.mxu0 0
    %175 = vmatpush1.bf16.msra.mxu0 0
    %176 = vmatprep.subr.bf16.mxu0 0
    %177 = vmatpush1.bf16.msra.mxu0 0
    %178 = vmatprep.mubr.bf16.mxu0 0
    %179 = vmatmul.mubr.bf16.gmra.mrb[0].mxu0 %v101
    %v180 = vpop.f32.mrb[0].mxu0
    %v181 = vadd.f32 %v70, %v180
    %v182 = vpop.f32.mrb[0].mxu0
    %v183 = vadd.f32 %v74, %v182
    %v184 = vpop.f32.mrb[0].mxu0
    %v185 = vadd.f32 %v70, %v184
    %v186 = vpop.f32.mrb[0].mxu0
    %v187 = vadd.f32 %v74, %v186
    %188 = vdwg.mxu0
    %v189 = vmax.f32 %v138, 0.0
    %v190 = vmax.f32 %v140, 0.0
    %v191 = vmax.f32 %v181, 0.0
    %v192 = vmax.f32 %v183, 0.0
    %v193 = vmax.f32 %v142, 0.0
    %v194 = vmax.f32 %v144, 0.0
    %v195 = vmax.f32 %v185, 0.0
    %v196 = vmax.f32 %v187, 0.0
    %v197 = vpack.c.bf16 %v193, %v189
    %v198 = vpack.c.bf16 %v194, %v190
    %v199 = vpack.c.bf16 %v195, %v191
    %v200 = vpack.c.bf16 %v196, %v192
    %v201 = vld [vmem:[#allocation2] sm:$0xff]
    %v202 = vld [vmem:[#allocation2 + $0x8] sm:$0xff]
    %v203 = vld [vmem:[#allocation2 + $0x10] sm:$0xff]
    %v204 = vld [vmem:[#allocation2 + $0x18] sm:$0xff]
    %v205 = vld [vmem:[#allocation2 + $0x20] sm:$0xff]
    %v206 = vld [vmem:[#allocation2 + $0x28] sm:$0xff]
    %v207 = vld [vmem:[#allocation2 + $0x30] sm:$0xff]
    %v208 = vld [vmem:[#allocation2 + $0x38] sm:$0xff]
    %v209 = vld [vmem:[#allocation2 + $0x40] sm:$0xff]
    %v210 = vld [vmem:[#allocation2 + $0x48] sm:$0xff]
    %v211 = vld [vmem:[#allocation2 + $0x50] sm:$0xff]
    %v212 = vld [vmem:[#allocation2 + $0x58] sm:$0xff]
    %v213 = vld [vmem:[#allocation2 + $0x60] sm:$0xff]
    %v214 = vld [vmem:[#allocation2 + $0x68] sm:$0xff]
    %v215 = vld [vmem:[#allocation2 + $0x70] sm:$0xff]
    %v216 = vld [vmem:[#allocation2 + $0x78] sm:$0xff]
    %v217 = vld [vmem:[#allocation2 + $0x80] sm:$0xff]
    %v218 = vld [vmem:[#allocation2 + $0x88] sm:$0xff]
    %v219 = vld [vmem:[#allocation2 + $0x90] sm:$0xff]
    %v220 = vld [vmem:[#allocation2 + $0x98] sm:$0xff]
    %v221 = vld [vmem:[#allocation2 + $0xa0] sm:$0xff]
    %v222 = vld [vmem:[#allocation2 + $0xa8] sm:$0xff]
    %v223 = vld [vmem:[#allocation2 + $0xb0] sm:$0xff]
    %v224 = vld [vmem:[#allocation2 + $0xb8] sm:$0xff]
    %v225 = vld [vmem:[#allocation2 + $0xc0] sm:$0xff]
    %v226 = vld [vmem:[#allocation2 + $0xc8] sm:$0xff]
    %v227 = vld [vmem:[#allocation2 + $0xd0] sm:$0xff]
    %v228 = vld [vmem:[#allocation2 + $0xd8] sm:$0xff]
    %v229 = vld [vmem:[#allocation2 + $0xe0] sm:$0xff]
    %v230 = vld [vmem:[#allocation2 + $0xe8] sm:$0xff]
    %v231 = vld [vmem:[#allocation2 + $0xf0] sm:$0xff]
    %v232 = vld [vmem:[#allocation2 + $0xf8] sm:$0xff]
    %v233 = vld [vmem:[#allocation2 + $0x100] sm:$0xff]
    %v234 = vld [vmem:[#allocation2 + $0x108] sm:$0xff]
    %v235 = vld [vmem:[#allocation2 + $0x110] sm:$0xff]
    %v236 = vld [vmem:[#allocation2 + $0x118] sm:$0xff]
    %v237 = vld [vmem:[#allocation2 + $0x120] sm:$0xff]
    %v238 = vld [vmem:[#allocation2 + $0x128] sm:$0xff]
    %v239 = vld [vmem:[#allocation2 + $0x130] sm:$0xff]
    %v240 = vld [vmem:[#allocation2 + $0x138] sm:$0xff]
    %v241 = vld [vmem:[#allocation2 + $0x140] sm:$0xff]
    %v242 = vld [vmem:[#allocation2 + $0x148] sm:$0xff]
    %v243 = vld [vmem:[#allocation2 + $0x150] sm:$0xff]
    %v244 = vld [vmem:[#allocation2 + $0x158] sm:$0xff]
    %v245 = vld [vmem:[#allocation2 + $0x160] sm:$0xff]
    %v246 = vld [vmem:[#allocation2 + $0x168] sm:$0xff]
    %v247 = vld [vmem:[#allocation2 + $0x170] sm:$0xff]
    %v248 = vld [vmem:[#allocation2 + $0x178] sm:$0xff]
    %v249 = vld [vmem:[#allocation2 + $0x180] sm:$0xff]
    %v250 = vld [vmem:[#allocation2 + $0x188] sm:$0xff]
    %v251 = vld [vmem:[#allocation2 + $0x190] sm:$0xff]
    %v252 = vld [vmem:[#allocation2 + $0x198] sm:$0xff]
    %v253 = vld [vmem:[#allocation2 + $0x1a0] sm:$0xff]
    %v254 = vld [vmem:[#allocation2 + $0x1a8] sm:$0xff]
    %v255 = vld [vmem:[#allocation2 + $0x1b0] sm:$0xff]
    %v256 = vld [vmem:[#allocation2 + $0x1b8] sm:$0xff]
    %v257 = vld [vmem:[#allocation2 + $0x1c0] sm:$0xff]
    %v258 = vld [vmem:[#allocation2 + $0x1c8] sm:$0xff]
    %v259 = vld [vmem:[#allocation2 + $0x1d0] sm:$0xff]
    %v260 = vld [vmem:[#allocation2 + $0x1d8] sm:$0xff]
    %v261 = vld [vmem:[#allocation2 + $0x1e0] sm:$0xff]
    %v262 = vld [vmem:[#allocation2 + $0x1e8] sm:$0xff]
    %v263 = vld [vmem:[#allocation2 + $0x1f0] sm:$0xff]
    %v264 = vld [vmem:[#allocation2 + $0x1f8] sm:$0xff]
    %v265 = vld [vmem:[%s5] sm:$0x3]
    %v267 = vlaneseq
    %v268 = vshrl.u32 %v267, 7
    %v269 = vsub.s32 0, %v268
    %v270 = vrot.slane %v265, %v269
    %v271 = vlaneseq
    %v272 = vshrl.u32 %v271, 7
    %v273 = vsub.s32 1, %v272
    %v274 = vrot.slane %v265, %v273
    %v341 = vunpack.c.l.b16 %v201
    %v342 = vunpack.c.h.b16 %v201
    %v343 = vunpack.c.l.b16 %v202
    %v344 = vunpack.c.h.b16 %v202
    %v345 = vunpack.c.l.b16 %v203
    %v346 = vunpack.c.h.b16 %v203
    %v347 = vunpack.c.l.b16 %v204
    %v348 = vunpack.c.h.b16 %v204
    %v349 = vunpack.c.l.b16 %v205
    %v350 = vunpack.c.h.b16 %v205
    %v351 = vunpack.c.l.b16 %v206
    %v352 = vunpack.c.h.b16 %v206
    %v353 = vunpack.c.l.b16 %v207
    %v354 = vunpack.c.h.b16 %v207
    %v355 = vunpack.c.l.b16 %v208
    %v356 = vunpack.c.h.b16 %v208
    %v357 = vunpack.c.l.b16 %v209
    %v358 = vunpack.c.h.b16 %v209
    %v359 = vunpack.c.l.b16 %v210
    %v360 = vunpack.c.h.b16 %v210
    %v361 = vunpack.c.l.b16 %v211
    %v362 = vunpack.c.h.b16 %v211
    %v363 = vunpack.c.l.b16 %v212
    %v364 = vunpack.c.h.b16 %v212
    %v365 = vunpack.c.l.b16 %v213
    %v366 = vunpack.c.h.b16 %v213
    %v367 = vunpack.c.l.b16 %v214
    %v368 = vunpack.c.h.b16 %v214
    %v369 = vunpack.c.l.b16 %v215
    %v370 = vunpack.c.h.b16 %v215
    %v371 = vunpack.c.l.b16 %v216
    %v372 = vunpack.c.h.b16 %v216
    %v373 = vunpack.c.l.b16 %v217
    %v374 = vunpack.c.h.b16 %v217
    %v375 = vunpack.c.l.b16 %v218
    %v376 = vunpack.c.h.b16 %v218
    %v377 = vunpack.c.l.b16 %v219
    %v378 = vunpack.c.h.b16 %v219
    %v379 = vunpack.c.l.b16 %v220
    %v380 = vunpack.c.h.b16 %v220
    %v381 = vunpack.c.l.b16 %v221
    %v382 = vunpack.c.h.b16 %v221
    %v383 = vunpack.c.l.b16 %v222
    %v384 = vunpack.c.h.b16 %v222
    %v385 = vunpack.c.l.b16 %v223
    %v386 = vunpack.c.h.b16 %v223
    %v387 = vunpack.c.l.b16 %v224
    %v388 = vunpack.c.h.b16 %v224
    %v389 = vunpack.c.l.b16 %v225
    %v390 = vunpack.c.h.b16 %v225
    %v391 = vunpack.c.l.b16 %v226
    %v392 = vunpack.c.h.b16 %v226
    %v393 = vunpack.c.l.b16 %v227
    %v394 = vunpack.c.h.b16 %v227
    %v395 = vunpack.c.l.b16 %v228
    %v396 = vunpack.c.h.b16 %v228
    %v397 = vunpack.c.l.b16 %v229
    %v398 = vunpack.c.h.b16 %v229
    %v399 = vunpack.c.l.b16 %v230
    %v400 = vunpack.c.h.b16 %v230
    %v401 = vunpack.c.l.b16 %v231
    %v402 = vunpack.c.h.b16 %v231
    %v403 = vunpack.c.l.b16 %v232
    %v404 = vunpack.c.h.b16 %v232
    %v405 = vunpack.c.l.b16 %v233
    %v406 = vunpack.c.h.b16 %v233
    %v407 = vunpack.c.l.b16 %v234
    %v408 = vunpack.c.h.b16 %v234
    %v409 = vunpack.c.l.b16 %v235
    %v410 = vunpack.c.h.b16 %v235
    %v411 = vunpack.c.l.b16 %v236
    %v412 = vunpack.c.h.b16 %v236
    %v413 = vunpack.c.l.b16 %v237
    %v414 = vunpack.c.h.b16 %v237
    %v415 = vunpack.c.l.b16 %v238
    %v416 = vunpack.c.h.b16 %v238
    %v417 = vunpack.c.l.b16 %v239
    %v418 = vunpack.c.h.b16 %v239
    %v419 = vunpack.c.l.b16 %v240
    %v420 = vunpack.c.h.b16 %v240
    %v421 = vunpack.c.l.b16 %v241
    %v422 = vunpack.c.h.b16 %v241
    %v423 = vunpack.c.l.b16 %v242
    %v424 = vunpack.c.h.b16 %v242
    %v425 = vunpack.c.l.b16 %v243
    %v426 = vunpack.c.h.b16 %v243
    %v427 = vunpack.c.l.b16 %v244
    %v428 = vunpack.c.h.b16 %v244
    %v429 = vunpack.c.l.b16 %v245
    %v430 = vunpack.c.h.b16 %v245
    %v431 = vunpack.c.l.b16 %v246
    %v432 = vunpack.c.h.b16 %v246
    %v433 = vunpack.c.l.b16 %v247
    %v434 = vunpack.c.h.b16 %v247
    %v435 = vunpack.c.l.b16 %v248
    %v436 = vunpack.c.h.b16 %v248
    %v437 = vunpack.c.l.b16 %v249
    %v438 = vunpack.c.h.b16 %v249
    %v439 = vunpack.c.l.b16 %v250
    %v440 = vunpack.c.h.b16 %v250
    %v441 = vunpack.c.l.b16 %v251
    %v442 = vunpack.c.h.b16 %v251
    %v443 = vunpack.c.l.b16 %v252
    %v444 = vunpack.c.h.b16 %v252
    %v445 = vunpack.c.l.b16 %v253
    %v446 = vunpack.c.h.b16 %v253
    %v447 = vunpack.c.l.b16 %v254
    %v448 = vunpack.c.h.b16 %v254
    %v449 = vunpack.c.l.b16 %v255
    %v450 = vunpack.c.h.b16 %v255
    %v451 = vunpack.c.l.b16 %v256
    %v452 = vunpack.c.h.b16 %v256
    %v453 = vunpack.c.l.b16 %v257
    %v454 = vunpack.c.h.b16 %v257
    %v455 = vunpack.c.l.b16 %v258
    %v456 = vunpack.c.h.b16 %v258
    %v457 = vunpack.c.l.b16 %v259
    %v458 = vunpack.c.h.b16 %v259
    %v459 = vunpack.c.l.b16 %v260
    %v460 = vunpack.c.h.b16 %v260
    %v461 = vunpack.c.l.b16 %v261
    %v462 = vunpack.c.h.b16 %v261
    %v463 = vunpack.c.l.b16 %v262
    %v464 = vunpack.c.h.b16 %v262
    %v465 = vunpack.c.l.b16 %v263
    %v466 = vunpack.c.h.b16 %v263
    %v467 = vunpack.c.l.b16 %v264
    %v468 = vunpack.c.h.b16 %v264
    %v469 = vpack.c.b16 %v343, %v341
    %v470 = vpack.c.b16 %v344, %v342
    %v471 = vpack.c.b16 %v347, %v345
    %v472 = vpack.c.b16 %v348, %v346
    %v473 = vpack.c.b16 %v351, %v349
    %v474 = vpack.c.b16 %v352, %v350
    %v475 = vpack.c.b16 %v355, %v353
    %v476 = vpack.c.b16 %v356, %v354
    %v477 = vpack.c.b16 %v359, %v357
    %v478 = vpack.c.b16 %v360, %v358
    %v479 = vpack.c.b16 %v363, %v361
    %v480 = vpack.c.b16 %v364, %v362
    %v481 = vpack.c.b16 %v367, %v365
    %v482 = vpack.c.b16 %v368, %v366
    %v483 = vpack.c.b16 %v371, %v369
    %v484 = vpack.c.b16 %v372, %v370
    %v485 = vpack.c.b16 %v375, %v373
    %v486 = vpack.c.b16 %v376, %v374
    %v487 = vpack.c.b16 %v379, %v377
    %v488 = vpack.c.b16 %v380, %v378
    %v489 = vpack.c.b16 %v383, %v381
    %v490 = vpack.c.b16 %v384, %v382
    %v491 = vpack.c.b16 %v387, %v385
    %v492 = vpack.c.b16 %v388, %v386
    %v493 = vpack.c.b16 %v391, %v389
    %v494 = vpack.c.b16 %v392, %v390
    %v495 = vpack.c.b16 %v395, %v393
    %v496 = vpack.c.b16 %v396, %v394
    %v497 = vpack.c.b16 %v399, %v397
    %v498 = vpack.c.b16 %v400, %v398
    %v499 = vpack.c.b16 %v403, %v401
    %v500 = vpack.c.b16 %v404, %v402
    %v501 = vpack.c.b16 %v407, %v405
    %v502 = vpack.c.b16 %v408, %v406
    %v503 = vpack.c.b16 %v411, %v409
    %v504 = vpack.c.b16 %v412, %v410
    %v505 = vpack.c.b16 %v415, %v413
    %v506 = vpack.c.b16 %v416, %v414
    %v507 = vpack.c.b16 %v419, %v417
    %v508 = vpack.c.b16 %v420, %v418
    %v509 = vpack.c.b16 %v423, %v421
    %v510 = vpack.c.b16 %v424, %v422
    %v511 = vpack.c.b16 %v427, %v425
    %v512 = vpack.c.b16 %v428, %v426
    %v513 = vpack.c.b16 %v431, %v429
    %v514 = vpack.c.b16 %v432, %v430
    %v515 = vpack.c.b16 %v435, %v433
    %v516 = vpack.c.b16 %v436, %v434
    %v517 = vpack.c.b16 %v439, %v437
    %v518 = vpack.c.b16 %v440, %v438
    %v519 = vpack.c.b16 %v443, %v441
    %v520 = vpack.c.b16 %v444, %v442
    %v521 = vpack.c.b16 %v447, %v445
    %v522 = vpack.c.b16 %v448, %v446
    %v523 = vpack.c.b16 %v451, %v449
    %v524 = vpack.c.b16 %v452, %v450
    %v525 = vpack.c.b16 %v455, %v453
    %v526 = vpack.c.b16 %v456, %v454
    %v527 = vpack.c.b16 %v459, %v457
    %v528 = vpack.c.b16 %v460, %v458
    %v529 = vpack.c.b16 %v463, %v461
    %v530 = vpack.c.b16 %v464, %v462
    %v531 = vpack.c.b16 %v467, %v465
    %v532 = vpack.c.b16 %v468, %v466
    %597 = vmatprep.subr.bf16.mxu0 %v470
    %598 = vmatpush1.bf16.msra.mxu0 %v469
    %599 = vmatprep.subr.bf16.mxu0 %v472
    %600 = vmatpush1.bf16.msra.mxu0 %v471
    %601 = vmatprep.subr.bf16.mxu0 %v474
    %602 = vmatpush1.bf16.msra.mxu0 %v473
    %603 = vmatprep.subr.bf16.mxu0 %v476
    %604 = vmatpush1.bf16.msra.mxu0 %v475
    %605 = vmatprep.subr.bf16.mxu0 %v478
    %606 = vmatpush1.bf16.msra.mxu0 %v477
    %607 = vmatprep.subr.bf16.mxu0 %v480
    %608 = vmatpush1.bf16.msra.mxu0 %v479
    %609 = vmatprep.subr.bf16.mxu0 %v482
    %610 = vmatpush1.bf16.msra.mxu0 %v481
    %611 = vmatprep.subr.bf16.mxu0 %v484
    %612 = vmatpush1.bf16.msra.mxu0 %v483
    %613 = vmatprep.subr.bf16.mxu0 %v486
    %614 = vmatpush1.bf16.msra.mxu0 %v485
    %615 = vmatprep.subr.bf16.mxu0 %v488
    %616 = vmatpush1.bf16.msra.mxu0 %v487
    %617 = vmatprep.subr.bf16.mxu0 %v490
    %618 = vmatpush1.bf16.msra.mxu0 %v489
    %619 = vmatprep.subr.bf16.mxu0 %v492
    %620 = vmatpush1.bf16.msra.mxu0 %v491
    %621 = vmatprep.subr.bf16.mxu0 %v494
    %622 = vmatpush1.bf16.msra.mxu0 %v493
    %623 = vmatprep.subr.bf16.mxu0 %v496
    %624 = vmatpush1.bf16.msra.mxu0 %v495
    %625 = vmatprep.subr.bf16.mxu0 %v498
    %626 = vmatpush1.bf16.msra.mxu0 %v497
    %627 = vmatprep.subr.bf16.mxu0 %v500
    %628 = vmatpush1.bf16.msra.mxu0 %v499
    %629 = vmatprep.mubr.bf16.mxu0 %v198
    %630 = vmatmul.mubr.bf16.gmra.mrb[0].mxu0 %v197
    %v631 = vpop.f32.mrb[0].mxu0
    %v632 = vadd.f32 %v270, %v631
    %v633 = vpop.f32.mrb[0].mxu0
    %v634 = vadd.f32 %v274, %v633
    %v635 = vpop.f32.mrb[0].mxu0
    %v636 = vadd.f32 %v270, %v635
    %v637 = vpop.f32.mrb[0].mxu0
    %v638 = vadd.f32 %v274, %v637
    %639 = vdwg.mxu0
    %640 = vmatprep.subr.bf16.mxu0 %v502
    %641 = vmatpush1.bf16.msra.mxu0 %v501
    %642 = vmatprep.subr.bf16.mxu0 %v504
    %643 = vmatpush1.bf16.msra.mxu0 %v503
    %644 = vmatprep.subr.bf16.mxu0 %v506
    %645 = vmatpush1.bf16.msra.mxu0 %v505
    %646 = vmatprep.subr.bf16.mxu0 %v508
    %647 = vmatpush1.bf16.msra.mxu0 %v507
    %648 = vmatprep.subr.bf16.mxu0 %v510
    %649 = vmatpush1.bf16.msra.mxu0 %v509
    %650 = vmatprep.subr.bf16.mxu0 %v512
    %651 = vmatpush1.bf16.msra.mxu0 %v511
    %652 = vmatprep.subr.bf16.mxu0 %v514
    %653 = vmatpush1.bf16.msra.mxu0 %v513
    %654 = vmatprep.subr.bf16.mxu0 %v516
    %655 = vmatpush1.bf16.msra.mxu0 %v515
    %656 = vmatprep.subr.bf16.mxu0 %v518
    %657 = vmatpush1.bf16.msra.mxu0 %v517
    %658 = vmatprep.subr.bf16.mxu0 %v520
    %659 = vmatpush1.bf16.msra.mxu0 %v519
    %660 = vmatprep.subr.bf16.mxu0 %v522
    %661 = vmatpush1.bf16.msra.mxu0 %v521
    %662 = vmatprep.subr.bf16.mxu0 %v524
    %663 = vmatpush1.bf16.msra.mxu0 %v523
    %664 = vmatprep.subr.bf16.mxu0 %v526
    %665 = vmatpush1.bf16.msra.mxu0 %v525
    %666 = vmatprep.subr.bf16.mxu0 %v528
    %667 = vmatpush1.bf16.msra.mxu0 %v527
    %668 = vmatprep.subr.bf16.mxu0 %v530
    %669 = vmatpush1.bf16.msra.mxu0 %v529
    %670 = vmatprep.subr.bf16.mxu0 %v532
    %671 = vmatpush1.bf16.msra.mxu0 %v531
    %672 = vmatprep.mubr.bf16.mxu0 %v200
    %673 = vmatmul.mubr.bf16.gmra.mrb[0].mxu0 %v199
    %v674 = vpop.f32.mrb[0].mxu0
    %v675 = vadd.f32 %v632, %v674
    %v676 = vpop.f32.mrb[0].mxu0
    %v677 = vadd.f32 %v634, %v676
    %v678 = vpop.f32.mrb[0].mxu0
    %v679 = vadd.f32 %v636, %v678
    %v680 = vpop.f32.mrb[0].mxu0
    %v681 = vadd.f32 %v638, %v680
    %682 = vdwg.mxu0
    %v683 = vmax.f32 %v675, 0.0
    %v684 = vmax.f32 %v677, 0.0
    %v685 = vmax.f32 %v679, 0.0
    %v686 = vmax.f32 %v681, 0.0
    %v687 = vpack.c.bf16 %v685, %v683
    %v688 = vpack.c.bf16 %v686, %v684
    %v689 = vld [vmem:[%s6] sm:$0xf]
    %v690 = vld [vmem:[%s6 + $0x4] sm:$0xf]
    %v691 = vld [vmem:[%s6 + $0x8] sm:$0xf]
    %v692 = vld [vmem:[%s6 + $0xc] sm:$0xf]
    %v693 = vld [vmem:[%s6 + $0x10] sm:$0xf]
    %v694 = vld [vmem:[%s6 + $0x14] sm:$0xf]
    %v695 = vld [vmem:[%s6 + $0x18] sm:$0xf]
    %v696 = vld [vmem:[%s6 + $0x1c] sm:$0xf]
    %v697 = vld [vmem:[%s6 + $0x20] sm:$0xf]
    %v698 = vld [vmem:[%s6 + $0x24] sm:$0xf]
    %v699 = vld [vmem:[%s6 + $0x28] sm:$0xf]
    %v700 = vld [vmem:[%s6 + $0x2c] sm:$0xf]
    %v701 = vld [vmem:[%s6 + $0x30] sm:$0xf]
    %v702 = vld [vmem:[%s6 + $0x34] sm:$0xf]
    %v703 = vld [vmem:[%s6 + $0x38] sm:$0xf]
    %v704 = vld [vmem:[%s6 + $0x3c] sm:$0xf]
    %v705 = vld [vmem:[%s6 + $0x40] sm:$0xf]
    %v706 = vld [vmem:[%s6 + $0x44] sm:$0xf]
    %v707 = vld [vmem:[%s6 + $0x48] sm:$0xf]
    %v708 = vld [vmem:[%s6 + $0x4c] sm:$0xf]
    %v709 = vld [vmem:[%s6 + $0x50] sm:$0xf]
    %v710 = vld [vmem:[%s6 + $0x54] sm:$0xf]
    %v711 = vld [vmem:[%s6 + $0x58] sm:$0xf]
    %v712 = vld [vmem:[%s6 + $0x5c] sm:$0xf]
    %v713 = vld [vmem:[%s6 + $0x60] sm:$0xf]
    %v714 = vld [vmem:[%s6 + $0x64] sm:$0xf]
    %v715 = vld [vmem:[%s6 + $0x68] sm:$0xf]
    %v716 = vld [vmem:[%s6 + $0x6c] sm:$0xf]
    %v717 = vld [vmem:[%s6 + $0x70] sm:$0xf]
    %v718 = vld [vmem:[%s6 + $0x74] sm:$0xf]
    %v719 = vld [vmem:[%s6 + $0x78] sm:$0xf]
    %v720 = vld [vmem:[%s6 + $0x7c] sm:$0xf]
    %v721 = vld [vmem:[%s7] sm:$0x1]
    %v723 = vlaneseq
    %v724 = vshrl.u32 %v723, 7
    %v725 = vsub.s32 0, %v724
    %v726 = vrot.slane %v721, %v725
    %v760 = vunpack.c.l.b16 %v689
    %v761 = vunpack.c.l.b16 %v690
    %v762 = vunpack.c.l.b16 %v691
    %v763 = vunpack.c.l.b16 %v692
    %v764 = vunpack.c.l.b16 %v693
    %v765 = vunpack.c.l.b16 %v694
    %v766 = vunpack.c.l.b16 %v695
    %v767 = vunpack.c.l.b16 %v696
    %v768 = vunpack.c.l.b16 %v697
    %v769 = vunpack.c.l.b16 %v698
    %v770 = vunpack.c.l.b16 %v699
    %v771 = vunpack.c.l.b16 %v700
    %v772 = vunpack.c.l.b16 %v701
    %v773 = vunpack.c.l.b16 %v702
    %v774 = vunpack.c.l.b16 %v703
    %v775 = vunpack.c.l.b16 %v704
    %v776 = vunpack.c.l.b16 %v705
    %v777 = vunpack.c.l.b16 %v706
    %v778 = vunpack.c.l.b16 %v707
    %v779 = vunpack.c.l.b16 %v708
    %v780 = vunpack.c.l.b16 %v709
    %v781 = vunpack.c.l.b16 %v710
    %v782 = vunpack.c.l.b16 %v711
    %v783 = vunpack.c.l.b16 %v712
    %v784 = vunpack.c.l.b16 %v713
    %v785 = vunpack.c.l.b16 %v714
    %v786 = vunpack.c.l.b16 %v715
    %v787 = vunpack.c.l.b16 %v716
    %v788 = vunpack.c.l.b16 %v717
    %v789 = vunpack.c.l.b16 %v718
    %v790 = vunpack.c.l.b16 %v719
    %v791 = vunpack.c.l.b16 %v720
    %v792 = vpack.c.b16 %v761, %v760
    %v793 = vpack.c.b16 %v763, %v762
    %v794 = vpack.c.b16 %v765, %v764
    %v795 = vpack.c.b16 %v767, %v766
    %v796 = vpack.c.b16 %v769, %v768
    %v797 = vpack.c.b16 %v771, %v770
    %v798 = vpack.c.b16 %v773, %v772
    %v799 = vpack.c.b16 %v775, %v774
    %v800 = vpack.c.b16 %v777, %v776
    %v801 = vpack.c.b16 %v779, %v778
    %v802 = vpack.c.b16 %v781, %v780
    %v803 = vpack.c.b16 %v783, %v782
    %v804 = vpack.c.b16 %v785, %v784
    %v805 = vpack.c.b16 %v787, %v786
    %v806 = vpack.c.b16 %v789, %v788
    %v807 = vpack.c.b16 %v791, %v790
    %824 = vmatprep.subr.bf16.mxu0 0
    %825 = vmatpush1.bf16.msra.mxu0 %v792
    %826 = vmatprep.subr.bf16.mxu0 0
    %827 = vmatpush1.bf16.msra.mxu0 %v793
    %828 = vmatprep.subr.bf16.mxu0 0
    %829 = vmatpush1.bf16.msra.mxu0 %v794
    %830 = vmatprep.subr.bf16.mxu0 0
    %831 = vmatpush1.bf16.msra.mxu0 %v795
    %832 = vmatprep.subr.bf16.mxu0 0
    %833 = vmatpush1.bf16.msra.mxu0 %v796
    %834 = vmatprep.subr.bf16.mxu0 0
    %835 = vmatpush1.bf16.msra.mxu0 %v797
    %836 = vmatprep.subr.bf16.mxu0 0
    %837 = vmatpush1.bf16.msra.mxu0 %v798
    %838 = vmatprep.subr.bf16.mxu0 0
    %839 = vmatpush1.bf16.msra.mxu0 %v799
    %840 = vmatprep.subr.bf16.mxu0 0
    %841 = vmatpush1.bf16.msra.mxu0 %v800
    %842 = vmatprep.subr.bf16.mxu0 0
    %843 = vmatpush1.bf16.msra.mxu0 %v801
    %844 = vmatprep.subr.bf16.mxu0 0
    %845 = vmatpush1.bf16.msra.mxu0 %v802
    %846 = vmatprep.subr.bf16.mxu0 0
    %847 = vmatpush1.bf16.msra.mxu0 %v803
    %848 = vmatprep.subr.bf16.mxu0 0
    %849 = vmatpush1.bf16.msra.mxu0 %v804
    %850 = vmatprep.subr.bf16.mxu0 0
    %851 = vmatpush1.bf16.msra.mxu0 %v805
    %852 = vmatprep.subr.bf16.mxu0 0
    %853 = vmatpush1.bf16.msra.mxu0 %v806
    %854 = vmatprep.subr.bf16.mxu0 0
    %855 = vmatpush1.bf16.msra.mxu0 %v807
    %856 = vmatprep.mubr.bf16.mxu0 %v688
    %857 = vmatmul.mubr.bf16.gmra.mrb[0].mxu0 %v687
    %v858 = vpop.f32.mrb[0].mxu0
    %v859 = vadd.f32 %v726, %v858
    %v860 = vpop.f32.mrb[0].mxu0
    %v861 = vpop.f32.mrb[0].mxu0
    %v862 = vadd.f32 %v726, %v861
    %v863 = vpop.f32.mrb[0].mxu0
    %864 = vdwg.mxu0
    %v865 = vmax.f32 %v859, 0.0
    %v866 = vmax.f32 %v862, 0.0
    %v867 = vpack.c.bf16 %v866, %v865
    %v868 = vld [vmem:[%s8] sm:$0xf]
    %v869 = vld [vmem:[%s8 + $0x4] sm:$0xf]
    %v870 = vld [vmem:[%s8 + $0x8] sm:$0xf]
    %v871 = vld [vmem:[%s8 + $0xc] sm:$0xf]
    %v872 = vld [vmem:[%s8 + $0x10] sm:$0xf]
    %v873 = vld [vmem:[%s8 + $0x14] sm:$0xf]
    %v874 = vld [vmem:[%s8 + $0x18] sm:$0xf]
    %v875 = vld [vmem:[%s8 + $0x1c] sm:$0xf]
    %v876 = vld [vmem:[%s9] sm:$0x1]
    %v878 = vlaneseq
    %v879 = vshrl.u32 %v878, 7
    %v880 = vsub.s32 0, %v879
    %v881 = vrot.slane %v876, %v880
    %v891 = vunpack.c.l.b16 %v868
    %v892 = vunpack.c.l.b16 %v869
    %v893 = vunpack.c.l.b16 %v870
    %v894 = vunpack.c.l.b16 %v871
    %v895 = vunpack.c.l.b16 %v872
    %v896 = vunpack.c.l.b16 %v873
    %v897 = vunpack.c.l.b16 %v874
    %v898 = vunpack.c.l.b16 %v875
    %v899 = vpack.c.b16 %v892, %v891
    %v900 = vpack.c.b16 %v894, %v893
    %v901 = vpack.c.b16 %v896, %v895
    %v902 = vpack.c.b16 %v898, %v897
    %vm907 = vcmask 523264
    %v909 = vsel %vm907, %v867, 0
    %911 = vmatprep.subr.bf16.mxu0 0
    %912 = vmatpush1.bf16.msra.mxu0 %v899
    %913 = vmatprep.subr.bf16.mxu0 0
    %914 = vmatpush1.bf16.msra.mxu0 %v900
    %915 = vmatprep.subr.bf16.mxu0 0
    %916 = vmatpush1.bf16.msra.mxu0 %v901
    %917 = vmatprep.subr.bf16.mxu0 0
    %918 = vmatpush1.bf16.msra.mxu0 %v902
    %919 = vmatprep.subr.bf16.mxu0 0
    %920 = vmatpush1.bf16.msra.mxu0 0
    %921 = vmatprep.subr.bf16.mxu0 0
    %922 = vmatpush1.bf16.msra.mxu0 0
    %923 = vmatprep.subr.bf16.mxu0 0
    %924 = vmatpush1.bf16.msra.mxu0 0
    %925 = vmatprep.subr.bf16.mxu0 0
    %926 = vmatpush1.bf16.msra.mxu0 0
    %927 = vmatprep.subr.bf16.mxu0 0
    %928 = vmatpush1.bf16.msra.mxu0 0
    %929 = vmatprep.subr.bf16.mxu0 0
    %930 = vmatpush1.bf16.msra.mxu0 0
    %931 = vmatprep.subr.bf16.mxu0 0
    %932 = vmatpush1.bf16.msra.mxu0 0
    %933 = vmatprep.subr.bf16.mxu0 0
    %934 = vmatpush1.bf16.msra.mxu0 0
    %935 = vmatprep.subr.bf16.mxu0 0
    %936 = vmatpush1.bf16.msra.mxu0 0
    %937 = vmatprep.subr.bf16.mxu0 0
    %938 = vmatpush1.bf16.msra.mxu0 0
    %939 = vmatprep.subr.bf16.mxu0 0
    %940 = vmatpush1.bf16.msra.mxu0 0
    %941 = vmatprep.subr.bf16.mxu0 0
    %942 = vmatpush1.bf16.msra.mxu0 0
    %943 = vmatprep.mubr.bf16.mxu0 0
    %944 = vmatmul.mubr.bf16.gmra.mrb[0].mxu0 %v909
    %v945 = vpop.f32.mrb[0].mxu0
    %v946 = vadd.f32 %v881, %v945
    %v947 = vpop.f32.mrb[0].mxu0
    %v948 = vpop.f32.mrb[0].mxu0
    %v949 = vadd.f32 %v881, %v948
    %v950 = vpop.f32.mrb[0].mxu0
    %951 = vdwg.mxu0
    %v952 = vmax.f32 %v946, 0.0
    %v953 = vmax.f32 %v949, 0.0
    %vm954 = vcmp.ne.f32.partialorder %v946, %v946
    %vm955 = vcmp.ne.f32.partialorder %v949, %v949
    %v956 = vadd.f32 %v946, 0.0
    %v957 = vadd.f32 %v949, 0.0
    %v958 = vand.u32 2147483647, %v946
    %v959 = vand.u32 2147483647, %v949
    %v960 = vsub.f32 0.0, %v958
    %v961 = vsub.f32 0.0, %v959
    %v962 = vmul.f32 %v960, 1.442695
    %v963 = vpow.pop %v962
    %v964 = vmul.f32 %v961, 1.442695
    %v965 = vpow.pop %v964
    %v966 = vadd.f32 %v963, 1.0
    %v967 = vlog2.pop %v966
    %v968 = vmul.f32 %v967, 0.6931472
    %v969 = vmul.f32 -0.5, %v963
    %v970 = vadd.f32 %v969, 1.0
    %v971 = vmul.f32 %v970, %v963
    %v972 = vand.u32 2147483647, %v963
    %vm973 = vcmp.lt.f32.partialorder %v972, 0.0004427343
    %v974 = vsel %vm973, %v971, %v968
    %v975 = vadd.f32 %v965, 1.0
    %v976 = vlog2.pop %v975
    %v977 = vmul.f32 %v976, 0.6931472
    %v978 = vmul.f32 -0.5, %v965
    %v979 = vadd.f32 %v978, 1.0
    %v980 = vmul.f32 %v979, %v965
    %v981 = vand.u32 2147483647, %v965
    %vm982 = vcmp.lt.f32.partialorder %v981, 0.0004427343
    %v983 = vsel %vm982, %v980, %v977
    %v984 = vadd.f32 %v952, %v974
    %v985 = vadd.f32 %v953, %v983
    %v986 = vsel %vm954, %v956, %v984
    %v987 = vsel %vm955, %v957, %v985
    %v988 = vld [vmem:[%s1] sm:$0xff]
    %v989 = vld [vmem:[%s1 + $0x8] sm:$0xff]
    %v990 = vmul.f32 %v988, -0.5
    %v991 = vmul.f32 %v989, -0.5
    %v992 = vmul.f32 %v990, %v988
    %v993 = vmul.f32 %v991, %v989
    %v994 = vlog2.pop %v986
    %v995 = vmul.f32 %v994, 0.6931472
    %v996 = vlog2.pop %v987
    %v997 = vmul.f32 %v996, 0.6931472
    %1000 = vrot.lane.b32.xlu0 %v995, 126
    %v1001 = vpop.permute.xlu0 %1000
    %1002 = vrot.lane.b32.xlu0 %v997, 126
    %v1003 = vpop.permute.xlu0 %1002
    %v1006 = vsub.f32 %v992, %v1001
    %v1007 = vsub.f32 %v993, %v1003
    %v1008 = vsub.f32 %v1006, 0.9189385
    %v1009 = vsub.f32 %v1007, 0.9189385
    %v1010 = vlaneseq
    %v1011 = vand.u32 %v1010, 127
    %vm1012 = vcmp.eq.s32.totalorder %v1011, 0
    %v1013 = vsub.f32 0.0, %v946
    %v1014 = vsub.f32 0.0, %v949
    %v1015 = vmul.f32 %v1013, 1.442695
    %v1016 = vpow.pop %v1015
    %v1017 = vmul.f32 %v1014, 1.442695
    %v1018 = vpow.pop %v1017
    %v1019 = vadd.f32 %v1016, 1.0
    %v1020 = vadd.f32 %v1018, 1.0
    %v1021 = vrcp.pop %v1019
    %v1022 = vrcp.pop %v1020
    %v1023 = vtanh.pop %v946
    %v1024 = vtanh.pop %v949
    %v1025 = vsel %vm1012, %v1023, %v1021
    %v1026 = vsel %vm1012, %v1024, %v1022
    %v1027 = vtanh.pop %v1025
    %v1028 = vtanh.pop %v1026
    %v1029 = vmul.f32 %v1027, %v1027
    %v1030 = vmul.f32 %v1028, %v1028
    %v1031 = vsub.f32 1.0, %v1029
    %v1032 = vsub.f32 1.0, %v1030
    %v1033 = vadd.f32 %v1031, 1e-07
    %v1034 = vadd.f32 %v1032, 1e-07
    %v1035 = vlog2.pop %v1033
    %v1036 = vmul.f32 %v1035, 0.6931472
    %v1037 = vlog2.pop %v1034
    %v1038 = vmul.f32 %v1037, 0.6931472
    %v1039 = vsub.f32 %v1008, %v1036
    %v1040 = vsub.f32 %v1009, %v1038
    %v1041 = vmul.f32 %v1025, 2.5
    %v1042 = vmul.f32 %v1026, 2.5
    %v1043 = vmul.f32 %v1025, 0.22
    %v1044 = vmul.f32 %v1026, 0.22
    %v1045 = vsel %vm1012, %v1041, %v1043
    %v1046 = vsel %vm1012, %v1042, %v1044
    %1049 = vrot.lane.b32.xlu0 %v1039, 2
    %v1050 = vpop.permute.xlu0 %1049
    %1051 = vrot.lane.b32.xlu0 %v1040, 2
    %v1052 = vpop.permute.xlu0 %1051
    %vm1055 = vcmask 15360
    %v1056 = vsel %vm1055, %v1045, %v1050
    %v1057 = vsel %vm1055, %v1046, %v1052
    %vm1058 = vcmask 31744
    %1059 = vst.msk [vmem:[%s10] sm:$0xff] %vm1058, %v1056
    %1060 = vst.msk [vmem:[%s10 + $0x8] sm:$0xff] %vm1058, %v1057
    // Predicated region
    $region46: #{tpu_custom_call.1} parent=1 // pred_check
      _
    $region47: #{tpu_custom_call.1} parent=1 // pred_check_branch
      %1062 = sbr.rel (0) target = $region49
    $region48: #{tpu_custom_call.1} parent=1 // pred_region
      _
    $region49: #{tpu_custom_call.1} parent=1 // pred_fallthru
      _
    // Predicated region
    $region50: #{tpu_custom_call.1} parent=1 // pred_check
      _
    $region51: #{tpu_custom_call.1} parent=1 // pred_check_branch
      %1064 = sbr.rel (0) target = $region53
    $region52: #{tpu_custom_call.1} parent=1 // pred_region
      _
    $region53: #{tpu_custom_call.1} parent=1 // pred_fallthru
      _
    %1065 = vsyncpa [#allocation3], 1

</llo_original>
